<compile_context>
chip_gen: v5e
topology: v5e:2x2
jax: 0.10.0
libtpu: 0.0.40
codegen_flags: <defaults>
</compile_context>

<pallas_src>
import jax
import jax.numpy as jnp
from jax.experimental import pallas as pl
from jax.experimental.pallas import tpu as pltpu


def _make_region_kernel(w, tn):
    """Kernel closure over static spatial width `w` and lane tile `tn`."""
    inv_w = 1.0 / float(w)

    def kernel(anc_ref, x_ref, o_ref):
        # anc_ref: (A, 2) f32 in SMEM   -> [anchor_w * w, anchor_h * h] per anchor
        # x_ref:   (D, TN) f32 in VMEM  -> raw outputs, D on sublanes, boxes on lanes
        # o_ref:   (D, TN) f32 in VMEM  -> [x1, y1, x2, y2, obj, class_probs...]
        a = pl.program_id(1)
        j = pl.program_id(2)

        x = x_ref[...]                                   # (D, TN)

        # One EUP pass for all sigmoids (rows 0,1,4; rows 2,3 are free filler).
        sig5 = jax.nn.sigmoid(x[0:5, :])                 # (5, TN)
        # One EUP pass for both exps; fold the /2 of cxcywh->xyxy in here.
        wh_half = jnp.exp(x[2:4, :]) * 0.5               # (2, TN)

        # Grid-cell offsets generated in-kernel (no HBM offset table).
        lane = jax.lax.broadcasted_iota(jnp.int32, (1, tn), 1)
        s = (j * tn + lane).astype(jnp.float32)          # global spatial idx y*w + x
        # floor((s + 0.5) / w) == s // w exactly for h*w < 2^22 (always true here).
        gy = jnp.floor((s + 0.5) * inv_w)
        gx = s - gy * w

        cx = sig5[0:1, :] + gx
        cy = sig5[1:2, :] + gy

        aw = anc_ref[a, 0]                               # anchor_w * w (SMEM scalar)
        ah = anc_ref[a, 1]                               # anchor_h * h
        half_w = wh_half[0:1, :] * aw
        half_h = wh_half[1:2, :] * ah

        # Direct slice stores (no sublane concatenate / extra VMEM temporary).
        o_ref[0:1, :] = cx - half_w
        o_ref[1:2, :] = cy - half_h
        o_ref[2:3, :] = cx + half_w
        o_ref[3:4, :] = cy + half_h
        o_ref[4:5, :] = sig5[4:5, :]

        # Class softmax over the sublane axis.
        logits = x[5:, :]
        m = jnp.max(logits, axis=0, keepdims=True)
        e = jnp.exp(logits - m)
        inv_den = pl.reciprocal(jnp.sum(e, axis=0, keepdims=True), approx=True)
        o_ref[5:, :] = e * inv_den

    return kernel


def _choose_lane_tile(hw, tn_max=8192):
    """Largest lane tile that divides hw and is a multiple of 128, capped at tn_max.

    tn_max=8192 keeps double-buffered in+out f32 blocks ~<= 11 MiB even at D=85,
    comfortably inside the 32 MiB scoped-VMEM default on every generation
    (including v7x's 64 MiB part)."""
    if hw <= tn_max:
        return hw
    tn = (tn_max // 128) * 128
    while tn >= 128:
        if hw % tn == 0:
            return tn
        tn -= 128
    return hw  # no clean 128-multiple divisor; fall back to a full-hw block


def region_forward(x, anchors, num_classes):
    """x: (b, A*(5+nc), h, w) NCHW float32 -> (b, h*w*A, 5+nc) (torch Region order)."""
    b, c, h, w = x.shape
    A = anchors.shape[0]
    D = 5 + num_classes
    assert c == A * D, "channel dim must equal num_anchors * (5 + num_classes)"
    hw = h * w

    # Zero-copy layout change: channel index = a*D + d, so a plain reshape gives
    # (b, A, D, hw) with D on sublanes and hw (lane-dense) on lanes.
    x4 = x.astype(jnp.float32).reshape(b, A, D, hw)

    # Per-anchor scales (anchor_w * w, anchor_h * h); tiny, lives in SMEM.
    anc_scaled = anchors.astype(jnp.float32) * jnp.array([w, h], dtype=jnp.float32)

    tn = _choose_lane_tile(hw)
    n_tiles = hw // tn

    kernel = _make_region_kernel(w, tn)

    out4 = pl.pallas_call(
        kernel,
        out_shape=jax.ShapeDtypeStruct((b, A, D, hw), jnp.float32),
        grid_spec=pltpu.PrefetchScalarGridSpec(
            num_scalar_prefetch=0,
            grid=(b, A, n_tiles),
            in_specs=[
                pl.BlockSpec(memory_space=pltpu.MemorySpace.SMEM),   # (A, 2) scales
                pl.BlockSpec((None, None, D, tn), lambda i, a, j: (i, a, 0, j)),
            ],
            out_specs=pl.BlockSpec((None, None, D, tn), lambda i, a, j: (i, a, 0, j)),
        ),
        compiler_params=pltpu.CompilerParams(
            # Pure map, every output block written once: all axes parallel so the
            # megacore / 2-TC parts can shard on batch, anchor or spatial tiles.
            dimension_semantics=("parallel", "parallel", "parallel"),
            # Tile sizing above keeps live blocks far below this; 32 MiB is safe
            # on v5e/v6e (128 MiB VMEM) and v7x (64 MiB physical).
            vmem_limit_bytes=32 * 1024 * 1024,
        ),
    )(anc_scaled, x4)

    # Single output-side layout op to recover torch's (y, x, anchor) box order.
    # Consumers that can take the lane-dense (b, A, D, h*w) layout should use
    # `out4` directly and skip this HBM round trip.
    return jnp.transpose(out4, (0, 3, 1, 2)).reshape(b, hw * A, D)


def region_reference(x, anchors, num_classes):
    """Pure-JAX reference mirroring the torch forward."""
    b, c, h, w = x.shape
    A = anchors.shape[0]
    D = 5 + num_classes
    N = h * w * A
    xr = jnp.transpose(x, (0, 2, 3, 1)).reshape(b, N, D).astype(jnp.float32)

    xs = jnp.arange(w, dtype=jnp.float32)
    ys = jnp.arange(h, dtype=jnp.float32)
    cxg = jnp.tile(xs, h)                      # x varies fastest (matches torch)
    cyg = jnp.repeat(ys, w)
    centers = jnp.stack([cxg, cyg], axis=1)    # (h*w, 2)
    scaled = anchors.astype(jnp.float32) * jnp.array([w, h], dtype=jnp.float32)
    allanc = jnp.concatenate(
        [jnp.broadcast_to(centers[:, None, :], (h * w, A, 2)),
         jnp.broadcast_to(scaled[None, :, :], (h * w, A, 2))],
        axis=2).reshape(N, 4)

    cxy = jax.nn.sigmoid(xr[:, :, 0:2]) + allanc[None, :, 0:2]
    wh = jnp.exp(xr[:, :, 2:4]) * allanc[None, :, 2:4]
    obj = jax.nn.sigmoid(xr[:, :, 4:5])
    probs = jax.nn.softmax(xr[:, :, 5:], axis=2)
    return jnp.concatenate([cxy - wh / 2, cxy + wh / 2, obj, probs], axis=-1)


if __name__ == "__main__":
    num_classes = 3
    anchors = jnp.array([[0.10, 0.20],
                         [0.35, 0.45]], dtype=jnp.float32)   # (A=2, 2)
    A = anchors.shape[0]
    D = 5 + num_classes                                      # 8
    b, h, w = 2, 16, 16                                      # hw = 256, N = 512

    key = jax.random.PRNGKey(0)
    x = jax.random.normal(key, (b, A * D, h, w), dtype=jnp.float32)

    region_jit = jax.jit(lambda xx, aa: region_forward(xx, aa, num_classes))
    out = jax.block_until_ready(region_jit(x, anchors))

    ref = region_reference(x, anchors, num_classes)
    assert out.shape == (b, h * w * A, D)
    # Slightly relaxed tolerance: softmax denominator uses the EUP approximate
    # reciprocal (class probs only; box coords / obj are exact-path).
    assert jnp.allclose(out, ref, atol=2e-3, rtol=2e-3), "mismatch vs reference"

    print("KERNEL_OK")
</pallas_src>

<mosaic_0001>
module attributes {stable_mosaic.version = 11 : i64} {
  func.func @kernel(%arg0: i32, %arg1: i32, %arg2: i32, %arg3: memref<2x2xf32, #tpu.memory_space<smem>>, %arg4: memref<1x1x8x256xf32, #tpu.memory_space<vmem>>, %arg5: memref<1x1x8x256xf32, #tpu.memory_space<vmem>>) attributes {dimension_semantics = [#tpu.dimension_semantics<parallel>, #tpu.dimension_semantics<parallel>, #tpu.dimension_semantics<parallel>], iteration_bounds = array<i64: 2, 2, 1>, scalar_prefetch = 0 : i64, scratch_operands = 0 : i64, tpu.core_type = #tpu.core_type<tc>, window_params = [{transform_indices = @transform_0, window_bounds = array<i64: 2, 2>}, {transform_indices = @transform_1, window_bounds = array<i64: 1, 1, 8, 256>}, {transform_indices = @transform_2, window_bounds = array<i64: 1, 1, 8, 256>}]} {
    %c0 = arith.constant 0 : index
    %c0_0 = arith.constant 0 : index
    %c0_1 = arith.constant 0 : index
    %c0_2 = arith.constant 0 : index
    %0 = vector.load %arg4[%c0, %c0_0, %c0_1, %c0_2] : memref<1x1x8x256xf32, #tpu.memory_space<vmem>>, vector<1x1x8x256xf32>
    %1 = vector.shape_cast %0 : vector<1x1x8x256xf32> to vector<8x256xf32>
    %2 = vector.extract_strided_slice %1 {offsets = [0, 0], sizes = [5, 256], strides = [1, 1]} : vector<8x256xf32> to vector<5x256xf32>
    %3 = arith.negf %2 : vector<5x256xf32>
    %4 = math.exp %3 : vector<5x256xf32>
    %cst = arith.constant 1.000000e+00 : f32
    %5 = vector.broadcast %cst : f32 to vector<5x256xf32>
    %6 = arith.addf %5, %4 : vector<5x256xf32>
    %7 = arith.divf %5, %6 : vector<5x256xf32>
    %8 = vector.extract_strided_slice %1 {offsets = [2, 0], sizes = [2, 256], strides = [1, 1]} : vector<8x256xf32> to vector<2x256xf32>
    %9 = math.exp %8 : vector<2x256xf32>
    %cst_3 = arith.constant 5.000000e-01 : f32
    %10 = vector.broadcast %cst_3 : f32 to vector<2x256xf32>
    %11 = arith.mulf %9, %10 : vector<2x256xf32>
    %12 = tpu.iota {dimensions = array<i32: 1>} : vector<1x256xi32>
    %c256_i32 = arith.constant 256 : i32
    %13 = arith.muli %arg2, %c256_i32 : i32
    %14 = vector.broadcast %13 : i32 to vector<1x256xi32>
    %15 = arith.addi %14, %12 : vector<1x256xi32>
    %16 = arith.sitofp %15 : vector<1x256xi32> to vector<1x256xf32>
    %cst_4 = arith.constant 5.000000e-01 : f32
    %17 = vector.broadcast %cst_4 : f32 to vector<1x256xf32>
    %18 = arith.addf %16, %17 : vector<1x256xf32>
    %cst_5 = arith.constant 6.250000e-02 : f32
    %19 = vector.broadcast %cst_5 : f32 to vector<1x256xf32>
    %20 = arith.mulf %18, %19 : vector<1x256xf32>
    %21 = math.floor %20 : vector<1x256xf32>
    %cst_6 = arith.constant 1.600000e+01 : f32
    %22 = vector.broadcast %cst_6 : f32 to vector<1x256xf32>
    %23 = arith.mulf %21, %22 : vector<1x256xf32>
    %24 = arith.subf %16, %23 : vector<1x256xf32>
    %25 = vector.extract_strided_slice %7 {offsets = [0, 0], sizes = [1, 256], strides = [1, 1]} : vector<5x256xf32> to vector<1x256xf32>
    %26 = arith.addf %25, %24 : vector<1x256xf32>
    %27 = vector.extract_strided_slice %7 {offsets = [1, 0], sizes = [1, 256], strides = [1, 1]} : vector<5x256xf32> to vector<1x256xf32>
    %28 = arith.addf %27, %21 : vector<1x256xf32>
    %29 = arith.index_cast %arg1 : i32 to index
    %c0_7 = arith.constant 0 : index
    %30 = memref.load %arg3[%29, %c0_7] : memref<2x2xf32, #tpu.memory_space<smem>>
    %31 = arith.index_cast %arg1 : i32 to index
    %c1 = arith.constant 1 : index
    %32 = memref.load %arg3[%31, %c1] : memref<2x2xf32, #tpu.memory_space<smem>>
    %33 = vector.extract_strided_slice %11 {offsets = [0, 0], sizes = [1, 256], strides = [1, 1]} : vector<2x256xf32> to vector<1x256xf32>
    %34 = vector.broadcast %30 : f32 to vector<1x256xf32>
    %35 = arith.mulf %33, %34 : vector<1x256xf32>
    %36 = vector.extract_strided_slice %11 {offsets = [1, 0], sizes = [1, 256], strides = [1, 1]} : vector<2x256xf32> to vector<1x256xf32>
    %37 = vector.broadcast %32 : f32 to vector<1x256xf32>
    %38 = arith.mulf %36, %37 : vector<1x256xf32>
    %39 = arith.subf %26, %35 : vector<1x256xf32>
    %c0_8 = arith.constant 0 : index
    %c0_9 = arith.constant 0 : index
    %c0_10 = arith.constant 0 : index
    %c0_11 = arith.constant 0 : index
    %40 = vector.load %arg5[%c0_8, %c0_9, %c0_10, %c0_11] : memref<1x1x8x256xf32, #tpu.memory_space<vmem>>, vector<1x1x1x256xf32>
    %41 = vector.shape_cast %40 : vector<1x1x1x256xf32> to vector<1x256xf32>
    %42 = vector.shape_cast %39 : vector<1x256xf32> to vector<1x1x1x256xf32>
    tpu.vector_store %arg5[%c0_8, %c0_9, %c0_10, %c0_11], %42 {strides = array<i32>} : memref<1x1x8x256xf32, #tpu.memory_space<vmem>>, vector<1x1x1x256xf32>,
    %43 = arith.subf %28, %38 : vector<1x256xf32>
    %c0_12 = arith.constant 0 : index
    %c0_13 = arith.constant 0 : index
    %c1_14 = arith.constant 1 : index
    %c0_15 = arith.constant 0 : index
    %44 = vector.load %arg5[%c0_12, %c0_13, %c1_14, %c0_15] : memref<1x1x8x256xf32, #tpu.memory_space<vmem>>, vector<1x1x1x256xf32>
    %45 = vector.shape_cast %44 : vector<1x1x1x256xf32> to vector<1x256xf32>
    %46 = vector.shape_cast %43 : vector<1x256xf32> to vector<1x1x1x256xf32>
    tpu.vector_store %arg5[%c0_12, %c0_13, %c1_14, %c0_15], %46 {strides = array<i32>} : memref<1x1x8x256xf32, #tpu.memory_space<vmem>>, vector<1x1x1x256xf32>,
    %47 = arith.addf %26, %35 : vector<1x256xf32>
    %c0_16 = arith.constant 0 : index
    %c0_17 = arith.constant 0 : index
    %c2 = arith.constant 2 : index
    %c0_18 = arith.constant 0 : index
    %48 = vector.load %arg5[%c0_16, %c0_17, %c2, %c0_18] : memref<1x1x8x256xf32, #tpu.memory_space<vmem>>, vector<1x1x1x256xf32>
    %49 = vector.shape_cast %48 : vector<1x1x1x256xf32> to vector<1x256xf32>
    %50 = vector.shape_cast %47 : vector<1x256xf32> to vector<1x1x1x256xf32>
    tpu.vector_store %arg5[%c0_16, %c0_17, %c2, %c0_18], %50 {strides = array<i32>} : memref<1x1x8x256xf32, #tpu.memory_space<vmem>>, vector<1x1x1x256xf32>,
    %51 = arith.addf %28, %38 : vector<1x256xf32>
    %c0_19 = arith.constant 0 : index
    %c0_20 = arith.constant 0 : index
    %c3 = arith.constant 3 : index
    %c0_21 = arith.constant 0 : index
    %52 = vector.load %arg5[%c0_19, %c0_20, %c3, %c0_21] : memref<1x1x8x256xf32, #tpu.memory_space<vmem>>, vector<1x1x1x256xf32>
    %53 = vector.shape_cast %52 : vector<1x1x1x256xf32> to vector<1x256xf32>
    %54 = vector.shape_cast %51 : vector<1x256xf32> to vector<1x1x1x256xf32>
    tpu.vector_store %arg5[%c0_19, %c0_20, %c3, %c0_21], %54 {strides = array<i32>} : memref<1x1x8x256xf32, #tpu.memory_space<vmem>>, vector<1x1x1x256xf32>,
    %55 = vector.extract_strided_slice %7 {offsets = [4, 0], sizes = [1, 256], strides = [1, 1]} : vector<5x256xf32> to vector<1x256xf32>
    %c0_22 = arith.constant 0 : index
    %c0_23 = arith.constant 0 : index
    %c4 = arith.constant 4 : index
    %c0_24 = arith.constant 0 : index
    %56 = vector.load %arg5[%c0_22, %c0_23, %c4, %c0_24] : memref<1x1x8x256xf32, #tpu.memory_space<vmem>>, vector<1x1x1x256xf32>
    %57 = vector.shape_cast %56 : vector<1x1x1x256xf32> to vector<1x256xf32>
    %58 = vector.shape_cast %55 : vector<1x256xf32> to vector<1x1x1x256xf32>
    tpu.vector_store %arg5[%c0_22, %c0_23, %c4, %c0_24], %58 {strides = array<i32>} : memref<1x1x8x256xf32, #tpu.memory_space<vmem>>, vector<1x1x1x256xf32>,
    %59 = vector.extract_strided_slice %1 {offsets = [5, 0], sizes = [3, 256], strides = [1, 1]} : vector<8x256xf32> to vector<3x256xf32>
    %cst_25 = arith.constant dense<0xFF800000> : vector<256xf32>
    %60 = vector.multi_reduction <maximumf>, %59, %cst_25 [0] : vector<3x256xf32> to vector<256xf32>
    %61 = vector.shape_cast %60 : vector<256xf32> to vector<1x256xf32>
    %62 = vector.broadcast %61 : vector<1x256xf32> to vector<3x256xf32>
    %63 = arith.subf %59, %62 : vector<3x256xf32>
    %64 = math.exp %63 : vector<3x256xf32>
    %cst_26 = arith.constant dense<0.000000e+00> : vector<256xf32>
    %65 = vector.multi_reduction <add>, %64, %cst_26 [0] : vector<3x256xf32> to vector<256xf32>
    %66 = vector.shape_cast %65 : vector<256xf32> to vector<1x256xf32>
    %67 = tpu.reciprocal %66 {approx = true} : vector<1x256xf32> -> vector<1x256xf32>
    %68 = vector.broadcast %67 : vector<1x256xf32> to vector<3x256xf32>
    %69 = arith.mulf %64, %68 : vector<3x256xf32>
    %c0_27 = arith.constant 0 : index
    %c0_28 = arith.constant 0 : index
    %c5 = arith.constant 5 : index
    %c0_29 = arith.constant 0 : index
    %70 = vector.load %arg5[%c0_27, %c0_28, %c5, %c0_29] : memref<1x1x8x256xf32, #tpu.memory_space<vmem>>, vector<1x1x3x256xf32>
    %71 = vector.shape_cast %70 : vector<1x1x3x256xf32> to vector<3x256xf32>
    %72 = vector.shape_cast %69 : vector<3x256xf32> to vector<1x1x3x256xf32>
    tpu.vector_store %arg5[%c0_27, %c0_28, %c5, %c0_29], %72 {strides = array<i32>} : memref<1x1x8x256xf32, #tpu.memory_space<vmem>>, vector<1x1x3x256xf32>,
    return
  }
  func.func @transform_0(%arg0: i32, %arg1: i32, %arg2: i32) -> (i32, i32) {
    %c0_i32 = arith.constant 0 : i32
    %c0_i32_0 = arith.constant 0 : i32
    %c0_i32_1 = arith.constant 0 : i32
    return %c0_i32, %c0_i32_0 : i32, i32
  }
  func.func @transform_1(%arg0: i32, %arg1: i32, %arg2: i32) -> (i32, i32, i32, i32) {
    %c0_i32 = arith.constant 0 : i32
    %c0_i32_0 = arith.constant 0 : i32
    return %arg0, %arg1, %c0_i32, %arg2 : i32, i32, i32, i32
  }
  func.func @transform_2(%arg0: i32, %arg1: i32, %arg2: i32) -> (i32, i32, i32, i32) {
    %c0_i32 = arith.constant 0 : i32
    %c0_i32_0 = arith.constant 0 : i32
    return %arg0, %arg1, %c0_i32, %arg2 : i32, i32, i32, i32
  }
}

</mosaic_0001>

<llo_original>
// kernel: _lambda_.1
$region0: #{_lambda_.1}
  #allocation0 [shape = 'u32[]', space=smem, size = 0x4, offset = 0x4, fixed_abs, tag = 'smem constant byte address 0x4 - core index']
  #allocation1 [shape = 'u32[72,128]{1,0:T(1,128)}', space=vmem, size = 0x9000, scoped, tag = 'internal scratch']
  %s0 = inlined_call_operand.vmem [shape: f32[2,2], index: 0, kind: input, shape index: {}]
  %s1 = inlined_call_operand.vmem [shape: f32[2,2,8,256], index: 1, kind: input, shape index: {}]
  %s2 = inlined_call_operand.vmem [shape: f32[2,2,8,256], index: 2, kind: output, shape index: {}]
  %s3 = sld [smem:[#allocation0]]
  $region45: #{_lambda_.1} parent=0
    _
  %s5 = ssub.s32 1, %s3
  %s6 = scalar_select 0, %s5, %s3
  $region1: #{_lambda_.1} parent=0
    #allocation2 [shape = 'u8[1024]{0}', space=smem, size = 0x400, scoped, tag = 'input window, operand 0, single buffered']
    #allocation3 [shape = 's32[2]{0}', space=sflag, size = 0x8, scoped, tag = 'scoped memory for _lambda_.1']
    %7 = vsyncpa [#allocation3], 0
    loop: start=0, step=1, limit=6
    $region2: #{_lambda_.1} parent=1 // loop_pre_header
      _
    $region3: #{_lambda_.1} parent=1 // loop_header
      %s9 = sphi 0, %s13
      %p10 = scmp.ge.s32.totalorder %s9, 6
      %s16 = sphi 0, %s35
      %s17 = sphi 0, %s31
      %s18 = sphi 0, %s27
      %s19 = sphi 0, %s16
      %s20 = sphi 0, %s17
      %s21 = sphi 0, %s18
      %s22 = sphi 0, %s19
      %s23 = sphi 0, %s20
      %s24 = sphi 0, %s21
      %s36 = sphi 0, %s36
      %s38 = sphi 0, %s36
      %s39 = sphi 0, %s38
      %s53 = sphi 0, %s39
      %s63 = sphi 0, %s65
      %s66 = sphi 0, %s63
      %s67 = sphi 0, %s66
      %s83 = sphi 0, %s67
      %s93 = sphi 0, %s95
      %s96 = sphi 0, %s93
      %s97 = sphi 0, %s96
      %s113 = sphi 0, %s97
    $region4: #{_lambda_.1} parent=1 // loop_header_branch
      %12 = sbr.rel (%p10) target = $region8
    $region5: #{_lambda_.1} parent=1 // loop_body
      %s14 = ssub.s32 %s9, 1
      %s15 = ssub.s32 %s9, 2
      %s25 = sadd.s32 1, %s18
      %p26 = scmp.ge.s32.totalorder %s25, 1
      %s27 = scalar_select %p26, 0, %s25
      %s28 = sadd.s32 1, %s17
      %s29 = scalar_select %p26, %s28, %s17
      %p30 = scmp.ge.s32.totalorder %s29, 2
      %s31 = scalar_select %p30, 0, %s29
      %s32 = sadd.s32 1, %s16
      %s33 = scalar_select %p30, %s32, %s16
      %p34 = scmp.ge.s32.totalorder %s33, 2
      %s35 = scalar_select %p34, 0, %s33
      %s37 = sadd.s32 %s36, 1
      %p40 = scmp.eq.s32.totalorder %s9, 3
      %p41 = scmp.ne.s32.totalorder %s36, %s38
      %p42 = scmp.eq.s32.totalorder %s9, 0
      %p43 = por %p41, %p42
      %p44 = scmp.ne.s32.totalorder %s36, %s38
      %p45 = scmp.eq.s32.totalorder %s14, 3
      %p46 = por %p44, %p45
      %p47 = scmp.ne.s32.totalorder %s38, %s39
      %p48 = scmp.eq.s32.totalorder %s14, 0
      %p49 = por %p47, %p48
      %p50 = scmp.ne.s32.totalorder %s38, %s39
      %p51 = scmp.eq.s32.totalorder %s15, 3
      %p52 = por %p50, %p51
      %p54 = scmp.ne.s32.totalorder %s39, %s53
      %p55 = scmp.eq.s32.totalorder %s15, 0
      %p56 = por %p54, %p55
      %s57 = ssub.s32 %s16, %s35
      %s58 = ssub.s32 %s17, %s31
      %s59 = sor.u32 %s57, %s58
      %s60 = ssub.s32 %s18, %s27
      %s61 = sor.u32 %s59, %s60
      %p62 = scmp.eq.s32.totalorder %s61, 0
      %s64 = sadd.s32 %s63, 1
      %s65 = scalar_select %p62, %s63, %s64
      %p68 = pneg %p62
      %p69 = scmp.eq.s32.totalorder %s9, 3
      %p70 = por %p68, %p69
      %p71 = scmp.ne.s32.totalorder %s63, %s66
      %p72 = scmp.eq.s32.totalorder %s9, 0
      %p73 = por %p71, %p72
      %p74 = scmp.ne.s32.totalorder %s63, %s66
      %p75 = scmp.eq.s32.totalorder %s14, 3
      %p76 = por %p74, %p75
      %p77 = scmp.ne.s32.totalorder %s66, %s67
      %p78 = scmp.eq.s32.totalorder %s14, 0
      %p79 = por %p77, %p78
      %p80 = scmp.ne.s32.totalorder %s66, %s67
      %p81 = scmp.eq.s32.totalorder %s15, 3
      %p82 = por %p80, %p81
      %p84 = scmp.ne.s32.totalorder %s67, %s83
      %p85 = scmp.eq.s32.totalorder %s15, 0
      %p86 = por %p84, %p85
      %s87 = ssub.s32 %s16, %s35
      %s88 = ssub.s32 %s17, %s31
      %s89 = sor.u32 %s87, %s88
      %s90 = ssub.s32 %s18, %s27
      %s91 = sor.u32 %s89, %s90
      %p92 = scmp.eq.s32.totalorder %s91, 0
      %s94 = sadd.s32 %s93, 1
      %s95 = scalar_select %p92, %s93, %s94
      %p98 = pneg %p92
      %p99 = scmp.eq.s32.totalorder %s9, 3
      %p100 = por %p98, %p99
      %p101 = scmp.ne.s32.totalorder %s93, %s96
      %p102 = scmp.eq.s32.totalorder %s9, 0
      %p103 = por %p101, %p102
      %p104 = scmp.ne.s32.totalorder %s93, %s96
      %p105 = scmp.eq.s32.totalorder %s14, 3
      %p106 = por %p104, %p105
      %p107 = scmp.ne.s32.totalorder %s96, %s97
      %p108 = scmp.eq.s32.totalorder %s14, 0
      %p109 = por %p107, %p108
      %p110 = scmp.ne.s32.totalorder %s96, %s97
      %p111 = scmp.eq.s32.totalorder %s15, 3
      %p112 = por %p110, %p111
      %p114 = scmp.ne.s32.totalorder %s97, %s113
      %p115 = scmp.eq.s32.totalorder %s15, 0
      %p116 = por %p114, %p115
      %p117 = scmp.le.s32.totalorder 1, %s9
      %p118 = scmp.lt.s32.totalorder %s9, 5
      %p119 = pnand %p117, %p118
      %p120 = pneg %p119
      // Predicated region
      $region9: #{_lambda_.1} parent=5 // pred_check
        _
      $region10: #{_lambda_.1} parent=5 // pred_check_branch
        %122 = sbr.rel (%p119) target = $region12
      $region11: #{_lambda_.1} parent=5 // pred_region
        %s123 = ssub.s32 %s9, 1
        // Predicated region
        $region13: #{_lambda_.1} parent=11 // pred_check
          %p124 = pneg %p49
        $region14: #{_lambda_.1} parent=11 // pred_check_branch
          %126 = sbr.rel (%p124) target = $region16
        $region15: #{_lambda_.1} parent=11 // pred_region
          %128 = vsyncadd [#allocation3], 0
          %s130 = sshll.u32 %s0, 4
          %s131 = int_to_ptr.vmem [resolvable:$true] %s130
          %133 = dma.vmem_to_smem %s131, 32, [#allocation2], [#allocation3]
        $region16: #{_lambda_.1} parent=11 // pred_fallthru
          _
      $region12: #{_lambda_.1} parent=5 // pred_fallthru
        _
      %p134 = scmp.lt.s32.totalorder %s9, 4
      // Predicated region
      $region17: #{_lambda_.1} parent=5 // pred_check
        %p135 = pneg %p134
      $region18: #{_lambda_.1} parent=5 // pred_check_branch
        %137 = sbr.rel (%p135) target = $region20
      $region19: #{_lambda_.1} parent=5 // pred_region
        // Predicated region
        $region21: #{_lambda_.1} parent=19 // pred_check
          %p138 = pneg %p73
        $region22: #{_lambda_.1} parent=19 // pred_check_branch
          %140 = sbr.rel (%p138) target = $region24
        $region23: #{_lambda_.1} parent=19 // pred_region
          %s141 = smul.u32 2, %s18
          %p142 = scmp.lt.s32.totalorder %s16, 1
          %s143 = scalar_select %p142, %s16, 1
          %p144 = scmp.lt.s32.totalorder %s17, 1
          %s145 = scalar_select %p144, %s17, 1
          %p146 = scmp.lt.s32.totalorder %s141, 1
          %s147 = scalar_select %p146, %s141, 1
          %s148 = smul.addr %s145, 2
          %s149 = sadd.s32 %s147, %s148
          %s150 = smul.addr %s143, 4
          %s151 = sadd.s32 %s149, %s150
          %s152 = smul.addr %s151, 8
          %s153 = scalar_lea.vmem %s1, %s152
          %s154 = smul.u32 2, %s18
        $region24: #{_lambda_.1} parent=19 // pred_fallthru
          _
      $region20: #{_lambda_.1} parent=5 // pred_fallthru
        _
      %p155 = scmp.le.s32.totalorder 1, %s9
      %p156 = scmp.lt.s32.totalorder %s9, 5
      %p157 = pnand %p155, %p156
      %p158 = pneg %p157
      // Predicated region
      $region25: #{_lambda_.1} parent=5 // pred_check
        _
      $region26: #{_lambda_.1} parent=5 // pred_check_branch
        %160 = sbr.rel (%p157) target = $region28
      $region27: #{_lambda_.1} parent=5 // pred_region
        %s161 = ssub.s32 %s9, 1
        // Predicated region
        $region29: #{_lambda_.1} parent=27 // pred_check
          %p162 = pneg %p49
        $region30: #{_lambda_.1} parent=27 // pred_check_branch
          %164 = sbr.rel (%p162) target = $region32
        $region31: #{_lambda_.1} parent=27 // pred_region
          %166 = dma.done [#allocation3], 32
        $region32: #{_lambda_.1} parent=27 // pred_fallthru
          _
        %167 = sfence
        %p168 = pneg %p49
        %p169 = pneg %p46
        %s170 = smul.u32 2, %s21
        %p171 = scmp.lt.s32.totalorder %s19, 1
        %s172 = scalar_select %p171, %s19, 1
        %p173 = scmp.lt.s32.totalorder %s20, 1
        %s174 = scalar_select %p173, %s20, 1
        %p175 = scmp.lt.s32.totalorder %s170, 1
        %s176 = scalar_select %p175, %s170, 1
        %s177 = smul.addr %s174, 2
        %s178 = sadd.s32 %s176, %s177
        %s179 = smul.addr %s172, 4
        %s180 = sadd.s32 %s178, %s179
        %s181 = smul.addr %s180, 8
        %s182 = scalar_lea.vmem %s1, %s181
        %p183 = pneg %p79
        %p184 = pneg %p76
        %p185 = pneg %p109
        %p186 = pneg %p106
        %s187 = smul.u32 2, %s21
        %p188 = scmp.lt.s32.totalorder %s19, 1
        %s189 = scalar_select %p188, %s19, 1
        %p190 = scmp.lt.s32.totalorder %s20, 1
        %s191 = scalar_select %p190, %s20, 1
        %p192 = scmp.lt.s32.totalorder %s187, 1
        %s193 = scalar_select %p192, %s187, 1
        %s194 = smul.addr %s191, 2
        %s195 = sadd.s32 %s193, %s194
        %s196 = smul.addr %s189, 4
        %s197 = sadd.s32 %s195, %s196
        %s198 = smul.addr %s197, 8
        %s199 = scalar_lea.vmem %s2, %s198
        %s200 = smul.u32 2, %s21
        %p201 = scmp.lt.s32.totalorder %s19, 1
        %s202 = scalar_select %p201, %s19, 1
        %p203 = scmp.lt.s32.totalorder %s20, 1
        %s204 = scalar_select %p203, %s20, 1
        %p205 = scmp.lt.s32.totalorder %s200, 1
        %s206 = scalar_select %p205, %s200, 1
        %s207 = smul.addr %s204, 2
        %s208 = sadd.s32 %s206, %s207
        %s209 = smul.addr %s202, 4
        %s210 = sadd.s32 %s208, %s209
        %s211 = smul.addr %s210, 8
        %s212 = scalar_lea.vmem %s1, %s211
        %s213 = smul.u32 2, %s21
        %s214 = smul.u32 2, %s21
        %p215 = scmp.lt.s32.totalorder %s19, 1
        %s216 = scalar_select %p215, %s19, 1
        %p217 = scmp.lt.s32.totalorder %s20, 1
        %s218 = scalar_select %p217, %s20, 1
        %p219 = scmp.lt.s32.totalorder %s214, 1
        %s220 = scalar_select %p219, %s214, 1
        %s221 = smul.addr %s218, 2
        %s222 = sadd.s32 %s220, %s221
        %s223 = smul.addr %s216, 4
        %s224 = sadd.s32 %s222, %s223
        %s225 = smul.addr %s224, 8
        %s226 = scalar_lea.vmem %s2, %s225
        %s227 = smul.u32 2, %s21
        %v228 = vld [vmem:[%s212] sm:$0xff]
        %v229 = vld [vmem:[%s212 + $0x8] sm:$0xff]
        %v230 = vxor.u32 %v228, 2147483648
        %v231 = vxor.u32 %v229, 2147483648
        %v232 = vmul.f32 %v230, 1.442695
        %v233 = vpow.pop %v232
        %v234 = vmul.f32 %v231, 1.442695
        %v235 = vpow.pop %v234
        %v236 = vadd.f32 %v233, 1.0
        %v237 = vadd.f32 %v235, 1.0
        %v238 = vrcp.pop %v236
        %v239 = vmul.f32 %v236, %v238
        %v240 = vsub.f32 1.0, %v239
        %v241 = vmul.f32 %v238, %v240
        %v242 = vadd.f32 %v238, %v241
        %vm243 = vweird.f32 %v236
        %vm244 = vweird.f32 %v238
        %vm245 = vmor %vm243, %vm244
        %v246 = vsel %vm245, %v238, %v242
        %v247 = vand.u32 2147483647, %v236
        %vm248 = vcmp.eq.f32.partialorder %v247, 8.507059e+37
        %v249 = vand.u32 %v236, 2147483648
        %v250 = vor.u32 1.1754944e-38, %v249
        %v251 = vsel %vm248, %v250, %v246
        %v252 = vmul.f32 1.0, %v251
        %v253 = vrcp.pop %v237
        %v254 = vmul.f32 %v237, %v253
        %v255 = vsub.f32 1.0, %v254
        %v256 = vmul.f32 %v253, %v255
        %v257 = vadd.f32 %v253, %v256
        %vm258 = vweird.f32 %v237
        %vm259 = vweird.f32 %v253
        %vm260 = vmor %vm258, %vm259
        %v261 = vsel %vm260, %v253, %v257
        %v262 = vand.u32 2147483647, %v237
        %vm263 = vcmp.eq.f32.partialorder %v262, 8.507059e+37
        %v264 = vand.u32 %v237, 2147483648
        %v265 = vor.u32 1.1754944e-38, %v264
        %v266 = vsel %vm263, %v265, %v261
        %v267 = vmul.f32 1.0, %v266
        %v268 = vmul.f32 %v228, 1.442695
        %v269 = vpow.pop %v268
        %v270 = vmul.f32 %v229, 1.442695
        %v271 = vpow.pop %v270
        %v272 = vmul.f32 %v269, 0.5
        %v273 = vmul.f32 %v271, 0.5
        %v274 = vlaneseq
        %v275 = vand.u32 %v274, 127
        %v276 = vadd.s32 %v275, 128
        %s277 = smul.u32 %s21, 256
        %v278 = vstv %s277
        %v279 = vadd.s32 %v278, %v275
        %v280 = vadd.s32 %v278, %v276
        %v281 = vcvt.s32.f32 %v279
        %v282 = vcvt.s32.f32 %v280
        %v283 = vadd.f32 %v281, 0.5
        %v284 = vadd.f32 %v282, 0.5
        %v285 = vmul.f32 %v283, 0.0625
        %v286 = vmul.f32 %v284, 0.0625
        %v287 = vfloor.f32 %v285
        %v288 = vfloor.f32 %v286
        %v289 = vmul.f32 %v287, 16.0
        %v290 = vmul.f32 %v288, 16.0
        %v291 = vsub.f32 %v281, %v289
        %v292 = vsub.f32 %v282, %v290
        %v293 = vadd.f32 %v252, %v291
        %v294 = vadd.f32 %v267, %v292
        %v295 = vadd.f32 %v252, %v287
        %v296 = vadd.f32 %v267, %v288
        %s297 = smul.u32 %s20, 128
        %s298 = sld [smem:[#allocation2 + %s297]]
        %s299 = sadd.s32 %s297, 1
        %s300 = sld [smem:[#allocation2 + %s299]]
        %v301 = vstv %s298
        %v302 = vmul.f32 %v272, %v301
        %v303 = vmul.f32 %v273, %v301
        %v304 = vstv %s300
        %v305 = vmul.f32 %v272, %v304
        %v306 = vmul.f32 %v273, %v304
        %v309 = vrot.slane %v302, 2
        %v310 = vrot.slane %v303, 2
        %v313 = vsub.f32 %v293, %v309
        %v314 = vsub.f32 %v294, %v310
        %v317 = vrot.slane %v314, 7
        %vm318 = vcmask 1040384
        %v319 = vsel %vm318, %v313, %v317
        %v321 = vlaneseq
        %vm322 = vcmp.ge.s32.totalorder %v321, 0
        %vm323 = vcmp.lt.s32.totalorder %v321, 256
        %vm324 = vmand %vm322, %vm323
        %325 = vst.msk [vmem:[%s226] ss:$8 sm:$0x3] %vm324, %v319
        %326 = vst.msk [vmem:[%s226] ss:$8 sm:$0x0] %vm324, %v319
        %v329 = vrot.slane %v305, 2
        %v330 = vrot.slane %v306, 2
        %v333 = vsub.f32 %v295, %v329
        %v334 = vsub.f32 %v296, %v330
        %337 = vst [vmem:[#allocation1] sm:$0xff] %v333
        %338 = vst [vmem:[#allocation1 + $0x9] sm:$0xff] %v334
        %s339 = scalar_lea.vmem [#allocation1], 1
        %v340 = vld [vmem:[%s339] ss:$9 sm:$0xff]
        %s342 = scalar_lea.vmem %s226, 1
        %343 = vst.msk [vmem:[%s342] ss:$8 sm:$0x3] %vm324, %v340
        %344 = vst.msk [vmem:[%s342] ss:$8 sm:$0x0] %vm324, %v340
        %v345 = vadd.f32 %v293, %v309
        %v346 = vadd.f32 %v294, %v310
        %v349 = vrot.slane %v346, 7
        %v350 = vsel %vm318, %v345, %v349
        %s352 = scalar_lea.vmem %s226, 2
        %353 = vst.msk [vmem:[%s352] ss:$8 sm:$0x3] %vm324, %v350
        %354 = vst.msk [vmem:[%s352] ss:$8 sm:$0x0] %vm324, %v350
        %v355 = vadd.f32 %v295, %v329
        %v356 = vadd.f32 %v296, %v330
        %359 = vst [vmem:[#allocation1] sm:$0xff] %v355
        %360 = vst [vmem:[#allocation1 + $0x9] sm:$0xff] %v356
        %s361 = scalar_lea.vmem [#allocation1], 1
        %v362 = vld [vmem:[%s361] ss:$9 sm:$0xff]
        %s364 = scalar_lea.vmem %s226, 3
        %365 = vst.msk [vmem:[%s364] ss:$8 sm:$0x3] %vm324, %v362
        %366 = vst.msk [vmem:[%s364] ss:$8 sm:$0x0] %vm324, %v362
        %369 = vst [vmem:[#allocation1] sm:$0xff] %v252
        %370 = vst [vmem:[#allocation1 + $0x9] sm:$0xff] %v267
        %s371 = scalar_lea.vmem [#allocation1], 4
        %v372 = vld [vmem:[%s371] ss:$9 sm:$0xff]
        %s374 = scalar_lea.vmem %s226, 4
        %375 = vst.msk [vmem:[%s374] ss:$8 sm:$0x3] %vm324, %v372
        %376 = vst.msk [vmem:[%s374] ss:$8 sm:$0x0] %vm324, %v372
        %vm377 = vcmask 1047557
        %v378 = vsel %vm377, %v228, -inf
        %v379 = vrot.slane %v378, 4
        %v380 = vmax.f32 %v378, %v379
        %v381 = vrot.slane %v380, 2
        %v382 = vmax.f32 %v380, %v381
        %v383 = vrot.slane %v382, 1
        %v384 = vmax.f32 %v382, %v383
        %v385 = vsel %vm377, %v229, -inf
        %v386 = vrot.slane %v385, 4
        %v387 = vmax.f32 %v385, %v386
        %v388 = vrot.slane %v387, 2
        %v389 = vmax.f32 %v387, %v388
        %v390 = vrot.slane %v389, 1
        %v391 = vmax.f32 %v389, %v390
        %v392 = vsub.f32 %v228, %v384
        %v393 = vsub.f32 %v229, %v391
        %v394 = vmul.f32 %v392, 1.442695
        %v395 = vpow.pop %v394
        %v396 = vmul.f32 %v393, 1.442695
        %v397 = vpow.pop %v396
        %v400 = vrot.slane %v395, 5
        %v401 = vrot.slane %v397, 5
        %vm404 = vcmask 1042432
        %v405 = vsel %vm404, %v400, 0.0
        %v406 = vrot.slane %v405, 4
        %v407 = vadd.f32 %v405, %v406
        %v408 = vrot.slane %v407, 2
        %v409 = vadd.f32 %v407, %v408
        %v410 = vrot.slane %v409, 1
        %v411 = vadd.f32 %v409, %v410
        %v412 = vsel %vm404, %v401, 0.0
        %v413 = vrot.slane %v412, 4
        %v414 = vadd.f32 %v412, %v413
        %v415 = vrot.slane %v414, 2
        %v416 = vadd.f32 %v414, %v415
        %v417 = vrot.slane %v416, 1
        %v418 = vadd.f32 %v416, %v417
        %v419 = vrcp.pop %v411
        %v420 = vrcp.pop %v418
        %v421 = vmul.f32 %v395, %v419
        %v422 = vmul.f32 %v397, %v420
        %423 = vst [vmem:[%s226] sm:$0xe0] %v421
        %424 = vst [vmem:[%s226 + $0x8] sm:$0xe0] %v422
        %s425 = smul.u32 2, %s21
        %p426 = scmp.lt.s32.totalorder %s19, 1
        %s427 = scalar_select %p426, %s19, 1
        %p428 = scmp.lt.s32.totalorder %s20, 1
        %s429 = scalar_select %p428, %s20, 1
        %p430 = scmp.lt.s32.totalorder %s425, 1
        %s431 = scalar_select %p430, %s425, 1
        %s432 = smul.addr %s429, 2
        %s433 = sadd.s32 %s431, %s432
        %s434 = smul.addr %s427, 4
        %s435 = sadd.s32 %s433, %s434
        %s436 = smul.addr %s435, 8
        %s437 = scalar_lea.vmem %s2, %s436
        // Predicated region
        $region33: #{_lambda_.1} parent=27 // pred_check
          %p438 = pneg %p106
        $region34: #{_lambda_.1} parent=27 // pred_check_branch
          %440 = sbr.rel (%p438) target = $region36
        $region35: #{_lambda_.1} parent=27 // pred_region
          %s441 = smul.u32 2, %s21
        $region36: #{_lambda_.1} parent=27 // pred_fallthru
          _
      $region28: #{_lambda_.1} parent=5 // pred_fallthru
        _
      %p442 = scmp.le.s32.totalorder 2, %s9
      // Predicated region
      $region37: #{_lambda_.1} parent=5 // pred_check
        %p443 = pneg %p442
      $region38: #{_lambda_.1} parent=5 // pred_check_branch
        %445 = sbr.rel (%p443) target = $region40
      $region39: #{_lambda_.1} parent=5 // pred_region
        %s446 = ssub.s32 %s9, 2
        // Predicated region
        $region41: #{_lambda_.1} parent=39 // pred_check
          %p447 = pneg %p112
        $region42: #{_lambda_.1} parent=39 // pred_check_branch
          %449 = sbr.rel (%p447) target = $region44
        $region43: #{_lambda_.1} parent=39 // pred_region
          %s450 = smul.u32 2, %s24
          %p451 = scmp.lt.s32.totalorder %s22, 1
          %s452 = scalar_select %p451, %s22, 1
          %p453 = scmp.lt.s32.totalorder %s23, 1
          %s454 = scalar_select %p453, %s23, 1
          %p455 = scmp.lt.s32.totalorder %s450, 1
          %s456 = scalar_select %p455, %s450, 1
          %s457 = smul.addr %s454, 2
          %s458 = sadd.s32 %s456, %s457
          %s459 = smul.addr %s452, 4
          %s460 = sadd.s32 %s458, %s459
          %s461 = smul.addr %s460, 8
          %s462 = scalar_lea.vmem %s2, %s461
        $region44: #{_lambda_.1} parent=39 // pred_fallthru
          _
      $region40: #{_lambda_.1} parent=5 // pred_fallthru
        _
    $region6: #{_lambda_.1} parent=1 // loop_footer
      %s13 = sadd.s32 1, %s9
    $region7: #{_lambda_.1} parent=1 // loop_footer_branch
      %8 = sbr.rel target = $region3
    $region8: #{_lambda_.1} parent=1 // loop_exit
      _
    %463 = vsyncpa [#allocation3], 1
    %s464 = scalar_lea.sflag [#allocation3], 1
    %465 = vsyncpa %s464, 1

</llo_original>
